<compile_context>
chip_gen: v6e
topology: v6e:2x2x1
jax: 0.10.0
libtpu: 0.0.40
codegen_flags: <defaults>
</compile_context>

<pallas_src>
import jax
import jax.numpy as jnp
from jax.experimental import pallas as pl
from jax.experimental.pallas import tpu as pltpu

_LANE = 128                              # vreg lane width
_TARGET_BLOCK_BYTES = 2 * 1024 * 1024    # ~2 MiB blocks


def _tanh_kernel(x_ref, o_ref):
    # Compute in f32 regardless of storage dtype (astype is a no-op for f32).
    x = x_ref[...].astype(jnp.float32)
    o_ref[...] = jnp.tanh(x).astype(o_ref.dtype)


def pallas_tanh(x: jax.Array) -> jax.Array:
    """Element-wise tanh via a Pallas TPU kernel. Works for any shape / float dtype."""
    orig_shape = x.shape
    orig_dtype = x.dtype

    n = x.size
    if n == 0:
        return x

    itemsize = jnp.dtype(orig_dtype).itemsize

    # Flatten to a lane-dense 2-D slab (rows, 128).
    x_flat = jnp.ravel(x)
    pad = (-n) % _LANE
    if pad:
        x_flat = jnp.pad(x_flat, (0, pad))
    rows = (n + pad) // _LANE
    x2d = x_flat.reshape(rows, _LANE)

    # Row tile giving ~2 MiB blocks; keep a multiple of 8 sublanes for f32
    # (16 for 2-byte dtypes) unless a single block covers the whole array.
    target_rows = max(8, _TARGET_BLOCK_BYTES // (_LANE * itemsize))
    sublane_mult = 8 * (4 // max(1, min(4, itemsize)))   # 8 for f32, 16 for bf16/fp16
    target_rows = max(sublane_mult, (target_rows // sublane_mult) * sublane_mult)

    if rows <= target_rows:
        tile_rows = rows                 # single block == full array (shape rule OK)
        grid = (1,)
    else:
        tile_rows = target_rows
        grid = (pl.cdiv(rows, tile_rows),)   # ragged last block handled by Pallas

    out2d = pl.pallas_call(
        _tanh_kernel,
        out_shape=jax.ShapeDtypeStruct((rows, _LANE), orig_dtype),
        grid_spec=pltpu.PrefetchScalarGridSpec(
            num_scalar_prefetch=0,
            grid=grid,
            in_specs=[pl.BlockSpec((tile_rows, _LANE), lambda i: (i, 0))],
            out_specs=pl.BlockSpec((tile_rows, _LANE), lambda i: (i, 0)),
        ),
        compiler_params=pltpu.CompilerParams(
            dimension_semantics=("parallel",),   # shard across v7x's 2 TCs
        ),
    )(x2d)

    if pad:
        return out2d.reshape(-1)[:n].reshape(orig_shape)
    return out2d.reshape(orig_shape)


if __name__ == "__main__":
    key = jax.random.PRNGKey(0)
    # Small NCHW-shaped input; wide range to exercise saturation (the naive
    # two-exp formula from the PyTorch reference would NaN here).
    x = jax.random.normal(key, (2, 4, 16, 16), dtype=jnp.float32) * 50.0

    out = jax.block_until_ready(pallas_tanh(x))

    ref = jnp.tanh(x)
    assert out.shape == x.shape and out.dtype == x.dtype
    assert jnp.allclose(out, ref, atol=1e-5, rtol=1e-5)
    assert not jnp.any(jnp.isnan(out))

    # Non-128-multiple, low-precision input path.
    y = jax.random.normal(jax.random.PRNGKey(1), (3, 5, 7), dtype=jnp.bfloat16)
    out_y = jax.block_until_ready(pallas_tanh(y))
    assert out_y.shape == y.shape and out_y.dtype == y.dtype
    assert jnp.allclose(out_y.astype(jnp.float32),
                        jnp.tanh(y.astype(jnp.float32)),
                        atol=2e-2, rtol=2e-2)

    print("KERNEL_OK")
</pallas_src>

<mosaic_0001>
module attributes {stable_mosaic.version = 11 : i64} {
  func.func @_tanh_kernel(%arg0: i32, %arg1: memref<16x128xf32, #tpu.memory_space<vmem>>, %arg2: memref<16x128xf32, #tpu.memory_space<vmem>>) attributes {dimension_semantics = [#tpu.dimension_semantics<parallel>], iteration_bounds = array<i64: 1>, scalar_prefetch = 0 : i64, scratch_operands = 0 : i64, tpu.core_type = #tpu.core_type<tc>, window_params = [{transform_indices = @transform_0, window_bounds = array<i64: 16, 128>}, {transform_indices = @transform_1, window_bounds = array<i64: 16, 128>}]} {
    %c0 = arith.constant 0 : index
    %c0_0 = arith.constant 0 : index
    %0 = vector.load %arg1[%c0, %c0_0] : memref<16x128xf32, #tpu.memory_space<vmem>>, vector<16x128xf32>
    %1 = math.tanh %0 : vector<16x128xf32>
    %c0_1 = arith.constant 0 : index
    %c0_2 = arith.constant 0 : index
    %2 = vector.load %arg2[%c0_1, %c0_2] : memref<16x128xf32, #tpu.memory_space<vmem>>, vector<16x128xf32>
    tpu.vector_store %arg2[%c0_1, %c0_2], %1 {strides = array<i32>} : memref<16x128xf32, #tpu.memory_space<vmem>>, vector<16x128xf32>,
    return
  }
  func.func @transform_0(%arg0: i32) -> (i32, i32) {
    %c0_i32 = arith.constant 0 : i32
    %c0_i32_0 = arith.constant 0 : i32
    return %arg0, %c0_i32 : i32, i32
  }
  func.func @transform_1(%arg0: i32) -> (i32, i32) {
    %c0_i32 = arith.constant 0 : i32
    %c0_i32_0 = arith.constant 0 : i32
    return %arg0, %c0_i32 : i32, i32
  }
}

</mosaic_0001>

<llo_original>
// kernel: tpu_custom_call.1
$region0: #{tpu_custom_call.1}
  #allocation0 [shape = 'u32[]', space=smem, size = 0x4, offset = 0x4, fixed_abs, tag = 'smem constant byte address 0x4 - core index']
  #allocation1 [shape = 'u32[144,128]{1,0:T(1,128)}', space=vmem, size = 0x12000, scoped, tag = 'internal scratch']
  %s0 = inlined_call_operand.hbm [shape: f32[16,128], index: 0, kind: input, shape index: {}]
  %s1 = inlined_call_operand.hbm [shape: f32[16,128], index: 1, kind: output, shape index: {}]
  %s2 = sld [smem:[#allocation0]]
  $region18: #{tpu_custom_call.1} parent=0
    _
  %s4 = ssub.s32 1, %s2
  %s5 = scalar_select 0, %s4, %s2
  $region1: #{tpu_custom_call.1} parent=0
    #allocation2 [shape = 'u8[8192]{0}', space=vmem, size = 0x2000, scoped, tag = 'input window, operand 0, single buffered']
    #allocation3 [shape = 's32[1]{0}', space=sflag, size = 0x4, scoped, tag = 'scoped memory for tpu_custom_call.1']
    #allocation4 [shape = 's32[1]{0}', space=sflag, size = 0x4, scoped, tag = 'scoped memory for tpu_custom_call.1']
    #allocation5 [shape = 'u8[8192]{0}', space=vmem, size = 0x2000, scoped, tag = 'output window, operand 0, single buffered']
    %6 = vsyncpa [#allocation3], 0
    %7 = vsyncpa [#allocation4], 0
    // Predicated region
    $region2: #{tpu_custom_call.1} parent=1 // pred_check
      _
    $region3: #{tpu_custom_call.1} parent=1 // pred_check_branch
      %9 = sbr.rel (0) target = $region5
    $region4: #{tpu_custom_call.1} parent=1 // pred_region
      %s11 = ssub.s32 256, 256
      %12 = vsyncadd [#allocation3], %s11
      %s13 = sshll.u32 [#allocation2], 4
      %s14 = int_to_ptr.vmem [resolvable:$true] %s13
      %19 = dma.hbm_to_vmem [thread:$0]  %s0, 256, %s14, [#allocation3], 128, 128, 8
    $region5: #{tpu_custom_call.1} parent=1 // pred_fallthru
      _
    // Predicated region
    $region6: #{tpu_custom_call.1} parent=1 // pred_check
      _
    $region7: #{tpu_custom_call.1} parent=1 // pred_check_branch
      %21 = sbr.rel (0) target = $region9
    $region8: #{tpu_custom_call.1} parent=1 // pred_region
      %22 = dma.done [#allocation3], 256
    $region9: #{tpu_custom_call.1} parent=1 // pred_fallthru
      _
    %v23 = vld [vmem:[#allocation2] sm:$0xff]
    %v24 = vld [vmem:[#allocation2 + $0x8] sm:$0xff]
    %v25 = vtanh.pop %v23
    %v26 = vtanh.pop %v24
    %27 = vst [vmem:[#allocation5] sm:$0xff] %v25
    %28 = vst [vmem:[#allocation5 + $0x8] sm:$0xff] %v26
    // Predicated region
    $region10: #{tpu_custom_call.1} parent=1 // pred_check
      _
    $region11: #{tpu_custom_call.1} parent=1 // pred_check_branch
      %30 = sbr.rel (0) target = $region13
    $region12: #{tpu_custom_call.1} parent=1 // pred_region
      %s32 = ssub.s32 256, 256
      %33 = vsyncadd [#allocation4], %s32
      %s34 = sshll.u32 [#allocation5], 4
      %s35 = int_to_ptr.vmem [resolvable:$true] %s34
      %40 = dma.vmem_to_hbm [thread:$0]  %s35, 256, %s1, [#allocation4], 128, 128, 8
    $region13: #{tpu_custom_call.1} parent=1 // pred_fallthru
      _
    // Predicated region
    $region14: #{tpu_custom_call.1} parent=1 // pred_check
      _
    $region15: #{tpu_custom_call.1} parent=1 // pred_check_branch
      %42 = sbr.rel (0) target = $region17
    $region16: #{tpu_custom_call.1} parent=1 // pred_region
      %43 = dma.done [#allocation4], 256
    $region17: #{tpu_custom_call.1} parent=1 // pred_fallthru
      _
    %44 = vsyncpa [#allocation3], 1
    %45 = vsyncpa [#allocation4], 1

</llo_original>
